<compile_context>
chip_gen: v7x
topology: tpu7x:2x2x1
jax: 0.10.0
libtpu: 0.0.40
codegen_flags: <defaults>
</compile_context>

<pallas_src>
import math

import jax
import jax.numpy as jnp
from jax import lax
from jax.experimental import pallas as pl
from jax.experimental.pallas import tpu as pltpu

_LANE = 128
_SUBLANE = 8


def _vmem_config():
    """Return (vmem_limit_bytes, per-output-block byte budget) for this chip."""
    try:
        cap = int(getattr(pltpu.get_tpu_info(), "vmem_capacity_bytes", 0)) or (64 << 20)
    except Exception:           # no TPU info -> conservative (v7x-safe) defaults
        cap = 64 << 20
    if cap >= (100 << 20):      # v5e / v6e: 128 MiB physical VMEM
        return 96 << 20, 24 << 20
    limit = min(56 << 20, int(cap * 0.85))   # v7x: 64 MiB physical (or smaller)
    return limit, min(12 << 20, max(limit // 4, 1 << 20))


def _pick_tiles_flat(q_len, k_len, hid, num_emb, itemsize, sublane_mult,
                     vmem_budget, out_block_bytes, tq=None, tk=None):
    """Tiles for the lane-flattened path: output block (tq, tk*hid)."""
    if tk is None:
        for d in range(k_len, 0, -1):
            if k_len % d or (d * hid) % _LANE:
                continue
            lane = d * hid
            table_b = 2 * num_emb * lane * itemsize            # worst-case 2 buffers
            min_out_b = 2 * sublane_mult * lane * itemsize     # minimal 2-buffered block
            if (table_b + min_out_b <= vmem_budget
                    and sublane_mult * lane * itemsize <= out_block_bytes):
                tk = d
                break
        if tk is None:
            tk = k_len          # full extent: always a legal block dim
    if tq is None:
        lane = tk * hid
        table_b = 2 * num_emb * lane * itemsize
        per_block = max(min(out_block_bytes, (vmem_budget - table_b) // 2),
                        sublane_mult * lane * itemsize)
        max_tq = max(1, per_block // (lane * itemsize))
        for d in range(min(q_len, max_tq), 0, -1):
            if q_len % d == 0 and d % sublane_mult == 0:
                tq = d
                break
        if tq is None:
            tq = q_len          # full extent: always legal
    return tq, tk


def _pick_tiles_3d(q_len, k_len, hid, num_emb, itemsize, sublane_mult,
                   vmem_budget, out_block_bytes, tq=None, tk=None):
    """Tiles for the hid%128==0 path: output block (tq, tk, hid)."""
    table_b = 2 * num_emb * hid * itemsize
    per_block = max(min(out_block_bytes, (vmem_budget - table_b) // 2),
                    sublane_mult * hid * itemsize)
    row_b = hid * itemsize
    if tk is None:
        for d in range(k_len, 0, -1):
            if k_len % d == 0 and d % sublane_mult == 0 and d * row_b <= per_block:
                tk = d
                break
        if tk is None:
            tk = k_len
    if tq is None:
        max_tq = max(1, per_block // (tk * row_b))
        tq = 1
        for d in range(min(q_len, max_tq), 0, -1):
            if q_len % d == 0:
                tq = d
                break
    return tq, tk


def _relpos_flat(emb, q_len, k_len, tq, tk, vmem_limit):
    """Lane-flattened path (hid % 128 != 0): blocks (tq, tk*hid)."""
    num_emb, hid = emb.shape
    k = (num_emb - 1) // 2
    n = tk * hid

    # Tile-local key index per flattened lane column (avoids in-kernel integer
    # division); tiny and resident across the whole grid.
    col_local = jnp.repeat(jnp.arange(tk, dtype=jnp.int32), hid)[None, :]   # (1, n)
    # Lane-pretiled table: emb_tiled[v, kk*hid + d] = emb[v, d]; resident.
    emb_tiled = jnp.tile(emb, (1, tk))                                      # (num_emb, n)

    def kernel(col_ref, emb_ref, out_ref):
        q0 = pl.program_id(0) * tq
        k0 = pl.program_id(1) * tk
        # Scalar bounds of the relative-position index occurring in this tile.
        lo = jnp.clip(k0 - (q0 + tq - 1), -k, k) + k
        hi = jnp.clip((k0 + tk - 1) - q0, -k, k) + k

        # Fast path: when lo == hi this single broadcast store IS the tile.
        out_ref[...] = jnp.broadcast_to(emb_ref[pl.ds(lo, 1), :],
                                        (tq, n)).astype(out_ref.dtype)

        @pl.when(lo < hi)
        def _():
            rows = q0 + lax.broadcasted_iota(jnp.int32, (tq, n), 0)
            cols = k0 + col_ref[...]                                 # (1, n)
            idx = jnp.clip(cols - rows, -k, k) + k                   # (tq, n)
            # Only table rows that can actually occur in this tile are applied.
            for v in range(1, num_emb):
                @pl.when(jnp.logical_and(lo < v, v <= hi))
                def _(v=v):
                    out_ref[...] = jnp.where(idx == v, emb_ref[v:v + 1, :],
                                             out_ref[...]).astype(out_ref.dtype)

    def run(table_mode):
        # TODO(synk): on v7x, if ("parallel","parallel") does not shard across both
        # TensorCores, switch the q axis to pltpu.CORE_PARALLEL for ~2x write BW.
        return pl.pallas_call(
            kernel,
            out_shape=jax.ShapeDtypeStruct((q_len, k_len * hid), emb.dtype),
            grid=(q_len // tq, k_len // tk),
            in_specs=[
                pl.BlockSpec((1, n), lambda i, j: (0, 0)),
                pl.BlockSpec((num_emb, n), lambda i, j: (0, 0),
                             pipeline_mode=table_mode),
            ],
            out_specs=pl.BlockSpec((tq, n), lambda i, j: (i, j)),
            compiler_params=pltpu.CompilerParams(
                dimension_semantics=("parallel", "parallel"),
                vmem_limit_bytes=vmem_limit,
            ),
        )(col_local, emb_tiled)

    try:
        out2d = run(pl.Buffered(1))    # table never changes -> one buffer suffices
    except Exception:
        out2d = run(None)              # fall back to default double-buffering
    return out2d.reshape(q_len, k_len, hid)


def _relpos_3d(emb, q_len, k_len, tq, tk, vmem_limit):
    """hid % 128 == 0 path: 3-D blocks (tq, tk, hid); no pretile / col ids."""
    num_emb, hid = emb.shape
    k = (num_emb - 1) // 2

    def kernel(emb_ref, out_ref):
        q0 = pl.program_id(0) * tq
        k0 = pl.program_id(1) * tk
        lo = jnp.clip(k0 - (q0 + tq - 1), -k, k) + k
        hi = jnp.clip((k0 + tk - 1) - q0, -k, k) + k

        row_lo = emb_ref[pl.ds(lo, 1), :].reshape(1, 1, hid)
        out_ref[...] = jnp.broadcast_to(row_lo, (tq, tk, hid)).astype(out_ref.dtype)

        @pl.when(lo < hi)
        def _():
            # Lane-dense index plane, built only for band tiles; cheap relative
            # to the HBM store this kernel is bound by.
            rows = lax.broadcasted_iota(jnp.int32, (tq, tk, hid), 0)
            cols = lax.broadcasted_iota(jnp.int32, (tq, tk, hid), 1)
            idx = jnp.clip((k0 + cols) - (q0 + rows), -k, k) + k
            for v in range(1, num_emb):
                @pl.when(jnp.logical_and(lo < v, v <= hi))
                def _(v=v):
                    row = emb_ref[v:v + 1, :].reshape(1, 1, hid)
                    out_ref[...] = jnp.where(idx == v, row,
                                             out_ref[...]).astype(out_ref.dtype)

    def run(table_mode):
        return pl.pallas_call(
            kernel,
            out_shape=jax.ShapeDtypeStruct((q_len, k_len, hid), emb.dtype),
            grid=(q_len // tq, k_len // tk),
            in_specs=[pl.BlockSpec((num_emb, hid), lambda i, j: (0, 0),
                                   pipeline_mode=table_mode)],
            out_specs=pl.BlockSpec((tq, tk, hid), lambda i, j: (i, j, 0)),
            compiler_params=pltpu.CompilerParams(
                dimension_semantics=("parallel", "parallel"),
                vmem_limit_bytes=vmem_limit,
            ),
        )(emb)

    try:
        return run(pl.Buffered(1))
    except Exception:
        return run(None)


def relative_position(embeddings: jax.Array, q_len: int, k_len: int,
                      *, tq: int | None = None, tk: int | None = None) -> jax.Array:
    """embeddings: (2k+1, hid_dim). Returns (q_len, k_len, hid_dim)."""
    num_emb, hid = embeddings.shape
    assert num_emb % 2 == 1, "embedding table must have 2k+1 rows"
    itemsize = jnp.dtype(embeddings.dtype).itemsize
    sublane_mult = _SUBLANE * max(1, 4 // itemsize)   # 8 f32 / 16 bf16 / 32 int8
    vmem_limit, out_block_bytes = _vmem_config()
    vmem_budget = max(vmem_limit - (8 << 20), vmem_limit // 2)

    if hid % _LANE == 0:
        tq, tk = _pick_tiles_3d(q_len, k_len, hid, num_emb, itemsize, sublane_mult,
                                vmem_budget, out_block_bytes, tq=tq, tk=tk)
        assert q_len % tq == 0 and k_len % tk == 0, (q_len, k_len, tq, tk)
        return _relpos_3d(embeddings, q_len, k_len, tq, tk, vmem_limit)

    tq, tk = _pick_tiles_flat(q_len, k_len, hid, num_emb, itemsize, sublane_mult,
                              vmem_budget, out_block_bytes, tq=tq, tk=tk)
    assert q_len % tq == 0 and k_len % tk == 0, (q_len, k_len, tq, tk)
    return _relpos_flat(embeddings, q_len, k_len, tq, tk, vmem_limit)


def init_embeddings(key, hid_dim: int, k: int, dtype=jnp.float32) -> jax.Array:
    """xavier_uniform on a (2k+1, hid_dim) parameter, matching nn.init.xavier_uniform_."""
    num_emb = 2 * k + 1
    bound = math.sqrt(6.0 / (num_emb + hid_dim))
    return jax.random.uniform(key, (num_emb, hid_dim), dtype=dtype,
                              minval=-bound, maxval=bound)


def _reference(embeddings, q_len, k_len, k):
    r_pos = jnp.arange(k_len)[None, :] - jnp.arange(q_len)[:, None]
    r_idx = jnp.clip(r_pos, -k, k) + k
    return jnp.take(embeddings, r_idx, axis=0)


if __name__ == "__main__":
    key0, key1 = jax.random.split(jax.random.PRNGKey(0))

    # Case 1: lane-flattened path (hid % 128 != 0), auto single-tile grid.
    hid_dim, k = 32, 4
    emb = init_embeddings(key0, hid_dim, k)
    out = jax.block_until_ready(relative_position(emb, 8, 8))
    assert out.shape == (8, 8, hid_dim), out.shape
    assert jnp.allclose(out, _reference(emb, 8, 8, k), atol=1e-6)

    # Case 2: lane-flattened path, forced multi-tile grid (exercises the
    # fast single-row tiles and the gated band tiles).
    out = jax.block_until_ready(relative_position(emb, 32, 32, tq=8, tk=8))
    assert out.shape == (32, 32, hid_dim), out.shape
    assert jnp.allclose(out, _reference(emb, 32, 32, k), atol=1e-6)

    # Case 3: lane-aligned 3-D path (hid % 128 == 0), auto grid and forced
    # multi-tile grid.
    hid_dim2, k2 = 128, 2
    emb2 = init_embeddings(key1, hid_dim2, k2)
    out2 = jax.block_until_ready(relative_position(emb2, 16, 16))
    assert out2.shape == (16, 16, hid_dim2), out2.shape
    assert jnp.allclose(out2, _reference(emb2, 16, 16, k2), atol=1e-6)
    out2 = jax.block_until_ready(relative_position(emb2, 32, 32, tq=8, tk=8))
    assert out2.shape == (32, 32, hid_dim2), out2.shape
    assert jnp.allclose(out2, _reference(emb2, 32, 32, k2), atol=1e-6)

    print("KERNEL_OK")
</pallas_src>

<mosaic_0001>
module attributes {stable_mosaic.version = 11 : i64} {
  func.func @kernel(%arg0: i32, %arg1: i32, %arg2: memref<1x256xi32, #tpu.memory_space<vmem>>, %arg3: memref<9x256xf32, #tpu.memory_space<vmem>>, %arg4: memref<8x256xf32, #tpu.memory_space<vmem>>) attributes {dimension_semantics = [#tpu.dimension_semantics<parallel>, #tpu.dimension_semantics<parallel>], iteration_bounds = array<i64: 1, 1>, scalar_prefetch = 0 : i64, scratch_operands = 0 : i64, tpu.core_type = #tpu.core_type<tc>, window_params = [{pipeline_mode = #tpu.pipeline_mode<synchronous>, transform_indices = @transform_0, window_bounds = array<i64: 1, 256>}, {pipeline_mode = #tpu.pipeline_mode<synchronous>, transform_indices = @transform_1, window_bounds = array<i64: 9, 256>}, {transform_indices = @transform_2, window_bounds = array<i64: 8, 256>}]} {
    %c8_i32 = arith.constant 8 : i32
    %0 = arith.muli %arg0, %c8_i32 : i32
    %c8_i32_0 = arith.constant 8 : i32
    %1 = arith.muli %arg1, %c8_i32_0 : i32
    %c8_i32_1 = arith.constant 8 : i32
    %2 = arith.addi %0, %c8_i32_1 : i32
    %c1_i32 = arith.constant 1 : i32
    %3 = arith.subi %2, %c1_i32 : i32
    %4 = arith.subi %1, %3 : i32
    %c-4_i32 = arith.constant -4 : i32
    %c4_i32 = arith.constant 4 : i32
    %5 = arith.maxsi %c-4_i32, %4 : i32
    %6 = arith.minsi %c4_i32, %5 : i32
    %c4_i32_2 = arith.constant 4 : i32
    %7 = arith.addi %6, %c4_i32_2 : i32
    %c8_i32_3 = arith.constant 8 : i32
    %8 = arith.addi %1, %c8_i32_3 : i32
    %c1_i32_4 = arith.constant 1 : i32
    %9 = arith.subi %8, %c1_i32_4 : i32
    %10 = arith.subi %9, %0 : i32
    %c-4_i32_5 = arith.constant -4 : i32
    %c4_i32_6 = arith.constant 4 : i32
    %11 = arith.maxsi %c-4_i32_5, %10 : i32
    %12 = arith.minsi %c4_i32_6, %11 : i32
    %c4_i32_7 = arith.constant 4 : i32
    %13 = arith.addi %12, %c4_i32_7 : i32
    %14 = arith.index_cast %7 : i32 to index
    %c0 = arith.constant 0 : index
    %15 = vector.load %arg3[%14, %c0] : memref<9x256xf32, #tpu.memory_space<vmem>>, vector<1x256xf32>
    %16 = vector.shape_cast %15 : vector<1x256xf32> to vector<1x256xf32>
    %17 = vector.broadcast %16 : vector<1x256xf32> to vector<8x256xf32>
    %c0_8 = arith.constant 0 : index
    %c0_9 = arith.constant 0 : index
    %18 = vector.load %arg4[%c0_8, %c0_9] : memref<8x256xf32, #tpu.memory_space<vmem>>, vector<8x256xf32>
    tpu.vector_store %arg4[%c0_8, %c0_9], %17 {strides = array<i32>} : memref<8x256xf32, #tpu.memory_space<vmem>>, vector<8x256xf32>,
    %19 = arith.cmpi slt, %7, %13 : i32
    %20 = arith.extui %19 : i1 to i32
    %c0_i32 = arith.constant 0 : i32
    %21 = arith.cmpi ne, %20, %c0_i32 : i32
    scf.if %21 {
      %22 = tpu.iota {dimensions = array<i32: 0>} : vector<8x256xi32>
      %23 = vector.broadcast %0 : i32 to vector<8x256xi32>
      %24 = arith.addi %23, %22 : vector<8x256xi32>
      %c0_10 = arith.constant 0 : index
      %c0_11 = arith.constant 0 : index
      %25 = vector.load %arg2[%c0_10, %c0_11] : memref<1x256xi32, #tpu.memory_space<vmem>>, vector<1x256xi32>
      %26 = vector.broadcast %1 : i32 to vector<1x256xi32>
      %27 = arith.addi %26, %25 : vector<1x256xi32>
      %28 = vector.broadcast %27 : vector<1x256xi32> to vector<8x256xi32>
      %29 = arith.subi %28, %24 : vector<8x256xi32>
      %c-4_i32_12 = arith.constant -4 : i32
      %c4_i32_13 = arith.constant 4 : i32
      %30 = vector.broadcast %c-4_i32_12 : i32 to vector<8x256xi32>
      %31 = arith.maxsi %30, %29 : vector<8x256xi32>
      %32 = vector.broadcast %c4_i32_13 : i32 to vector<8x256xi32>
      %33 = arith.minsi %32, %31 : vector<8x256xi32>
      %c4_i32_14 = arith.constant 4 : i32
      %34 = vector.broadcast %c4_i32_14 : i32 to vector<8x256xi32>
      %35 = arith.addi %33, %34 : vector<8x256xi32>
      %c1_i32_15 = arith.constant 1 : i32
      %36 = arith.cmpi slt, %7, %c1_i32_15 : i32
      %c1_i32_16 = arith.constant 1 : i32
      %37 = arith.cmpi sge, %13, %c1_i32_16 : i32
      %38 = arith.andi %36, %37 : i1
      %39 = arith.extui %38 : i1 to i32
      %c0_i32_17 = arith.constant 0 : i32
      %40 = arith.cmpi ne, %39, %c0_i32_17 : i32
      scf.if %40 {
        %c1_i32_34 = arith.constant 1 : i32
        %76 = vector.broadcast %c1_i32_34 : i32 to vector<8x256xi32>
        %77 = arith.cmpi eq, %35, %76 : vector<8x256xi32>
        %c1 = arith.constant 1 : index
        %c0_35 = arith.constant 0 : index
        %78 = vector.load %arg3[%c1, %c0_35] : memref<9x256xf32, #tpu.memory_space<vmem>>, vector<1x256xf32>
        %c0_36 = arith.constant 0 : index
        %c0_37 = arith.constant 0 : index
        %79 = vector.load %arg4[%c0_36, %c0_37] : memref<8x256xf32, #tpu.memory_space<vmem>>, vector<8x256xf32>
        %80 = vector.shape_cast %78 : vector<1x256xf32> to vector<1x256xf32>
        %81 = vector.broadcast %80 : vector<1x256xf32> to vector<8x256xf32>
        %82 = arith.select %77, %81, %79 : vector<8x256xi1>, vector<8x256xf32>
        %c0_38 = arith.constant 0 : index
        %c0_39 = arith.constant 0 : index
        %83 = vector.load %arg4[%c0_38, %c0_39] : memref<8x256xf32, #tpu.memory_space<vmem>>, vector<8x256xf32>
        tpu.vector_store %arg4[%c0_38, %c0_39], %82 {strides = array<i32>} : memref<8x256xf32, #tpu.memory_space<vmem>>, vector<8x256xf32>,
      } else {
      }
      %c2_i32 = arith.constant 2 : i32
      %41 = arith.cmpi slt, %7, %c2_i32 : i32
      %c2_i32_18 = arith.constant 2 : i32
      %42 = arith.cmpi sge, %13, %c2_i32_18 : i32
      %43 = arith.andi %41, %42 : i1
      %44 = arith.extui %43 : i1 to i32
      %c0_i32_19 = arith.constant 0 : i32
      %45 = arith.cmpi ne, %44, %c0_i32_19 : i32
      scf.if %45 {
        %c2_i32_34 = arith.constant 2 : i32
        %76 = vector.broadcast %c2_i32_34 : i32 to vector<8x256xi32>
        %77 = arith.cmpi eq, %35, %76 : vector<8x256xi32>
        %c2 = arith.constant 2 : index
        %c0_35 = arith.constant 0 : index
        %78 = vector.load %arg3[%c2, %c0_35] : memref<9x256xf32, #tpu.memory_space<vmem>>, vector<1x256xf32>
        %c0_36 = arith.constant 0 : index
        %c0_37 = arith.constant 0 : index
        %79 = vector.load %arg4[%c0_36, %c0_37] : memref<8x256xf32, #tpu.memory_space<vmem>>, vector<8x256xf32>
        %80 = vector.shape_cast %78 : vector<1x256xf32> to vector<1x256xf32>
        %81 = vector.broadcast %80 : vector<1x256xf32> to vector<8x256xf32>
        %82 = arith.select %77, %81, %79 : vector<8x256xi1>, vector<8x256xf32>
        %c0_38 = arith.constant 0 : index
        %c0_39 = arith.constant 0 : index
        %83 = vector.load %arg4[%c0_38, %c0_39] : memref<8x256xf32, #tpu.memory_space<vmem>>, vector<8x256xf32>
        tpu.vector_store %arg4[%c0_38, %c0_39], %82 {strides = array<i32>} : memref<8x256xf32, #tpu.memory_space<vmem>>, vector<8x256xf32>,
      } else {
      }
      %c3_i32 = arith.constant 3 : i32
      %46 = arith.cmpi slt, %7, %c3_i32 : i32
      %c3_i32_20 = arith.constant 3 : i32
      %47 = arith.cmpi sge, %13, %c3_i32_20 : i32
      %48 = arith.andi %46, %47 : i1
      %49 = arith.extui %48 : i1 to i32
      %c0_i32_21 = arith.constant 0 : i32
      %50 = arith.cmpi ne, %49, %c0_i32_21 : i32
      scf.if %50 {
        %c3_i32_34 = arith.constant 3 : i32
        %76 = vector.broadcast %c3_i32_34 : i32 to vector<8x256xi32>
        %77 = arith.cmpi eq, %35, %76 : vector<8x256xi32>
        %c3 = arith.constant 3 : index
        %c0_35 = arith.constant 0 : index
        %78 = vector.load %arg3[%c3, %c0_35] : memref<9x256xf32, #tpu.memory_space<vmem>>, vector<1x256xf32>
        %c0_36 = arith.constant 0 : index
        %c0_37 = arith.constant 0 : index
        %79 = vector.load %arg4[%c0_36, %c0_37] : memref<8x256xf32, #tpu.memory_space<vmem>>, vector<8x256xf32>
        %80 = vector.shape_cast %78 : vector<1x256xf32> to vector<1x256xf32>
        %81 = vector.broadcast %80 : vector<1x256xf32> to vector<8x256xf32>
        %82 = arith.select %77, %81, %79 : vector<8x256xi1>, vector<8x256xf32>
        %c0_38 = arith.constant 0 : index
        %c0_39 = arith.constant 0 : index
        %83 = vector.load %arg4[%c0_38, %c0_39] : memref<8x256xf32, #tpu.memory_space<vmem>>, vector<8x256xf32>
        tpu.vector_store %arg4[%c0_38, %c0_39], %82 {strides = array<i32>} : memref<8x256xf32, #tpu.memory_space<vmem>>, vector<8x256xf32>,
      } else {
      }
      %c4_i32_22 = arith.constant 4 : i32
      %51 = arith.cmpi slt, %7, %c4_i32_22 : i32
      %c4_i32_23 = arith.constant 4 : i32
      %52 = arith.cmpi sge, %13, %c4_i32_23 : i32
      %53 = arith.andi %51, %52 : i1
      %54 = arith.extui %53 : i1 to i32
      %c0_i32_24 = arith.constant 0 : i32
      %55 = arith.cmpi ne, %54, %c0_i32_24 : i32
      scf.if %55 {
        %c4_i32_34 = arith.constant 4 : i32
        %76 = vector.broadcast %c4_i32_34 : i32 to vector<8x256xi32>
        %77 = arith.cmpi eq, %35, %76 : vector<8x256xi32>
        %c4 = arith.constant 4 : index
        %c0_35 = arith.constant 0 : index
        %78 = vector.load %arg3[%c4, %c0_35] : memref<9x256xf32, #tpu.memory_space<vmem>>, vector<1x256xf32>
        %c0_36 = arith.constant 0 : index
        %c0_37 = arith.constant 0 : index
        %79 = vector.load %arg4[%c0_36, %c0_37] : memref<8x256xf32, #tpu.memory_space<vmem>>, vector<8x256xf32>
        %80 = vector.shape_cast %78 : vector<1x256xf32> to vector<1x256xf32>
        %81 = vector.broadcast %80 : vector<1x256xf32> to vector<8x256xf32>
        %82 = arith.select %77, %81, %79 : vector<8x256xi1>, vector<8x256xf32>
        %c0_38 = arith.constant 0 : index
        %c0_39 = arith.constant 0 : index
        %83 = vector.load %arg4[%c0_38, %c0_39] : memref<8x256xf32, #tpu.memory_space<vmem>>, vector<8x256xf32>
        tpu.vector_store %arg4[%c0_38, %c0_39], %82 {strides = array<i32>} : memref<8x256xf32, #tpu.memory_space<vmem>>, vector<8x256xf32>,
      } else {
      }
      %c5_i32 = arith.constant 5 : i32
      %56 = arith.cmpi slt, %7, %c5_i32 : i32
      %c5_i32_25 = arith.constant 5 : i32
      %57 = arith.cmpi sge, %13, %c5_i32_25 : i32
      %58 = arith.andi %56, %57 : i1
      %59 = arith.extui %58 : i1 to i32
      %c0_i32_26 = arith.constant 0 : i32
      %60 = arith.cmpi ne, %59, %c0_i32_26 : i32
      scf.if %60 {
        %c5_i32_34 = arith.constant 5 : i32
        %76 = vector.broadcast %c5_i32_34 : i32 to vector<8x256xi32>
        %77 = arith.cmpi eq, %35, %76 : vector<8x256xi32>
        %c5 = arith.constant 5 : index
        %c0_35 = arith.constant 0 : index
        %78 = vector.load %arg3[%c5, %c0_35] : memref<9x256xf32, #tpu.memory_space<vmem>>, vector<1x256xf32>
        %c0_36 = arith.constant 0 : index
        %c0_37 = arith.constant 0 : index
        %79 = vector.load %arg4[%c0_36, %c0_37] : memref<8x256xf32, #tpu.memory_space<vmem>>, vector<8x256xf32>
        %80 = vector.shape_cast %78 : vector<1x256xf32> to vector<1x256xf32>
        %81 = vector.broadcast %80 : vector<1x256xf32> to vector<8x256xf32>
        %82 = arith.select %77, %81, %79 : vector<8x256xi1>, vector<8x256xf32>
        %c0_38 = arith.constant 0 : index
        %c0_39 = arith.constant 0 : index
        %83 = vector.load %arg4[%c0_38, %c0_39] : memref<8x256xf32, #tpu.memory_space<vmem>>, vector<8x256xf32>
        tpu.vector_store %arg4[%c0_38, %c0_39], %82 {strides = array<i32>} : memref<8x256xf32, #tpu.memory_space<vmem>>, vector<8x256xf32>,
      } else {
      }
      %c6_i32 = arith.constant 6 : i32
      %61 = arith.cmpi slt, %7, %c6_i32 : i32
      %c6_i32_27 = arith.constant 6 : i32
      %62 = arith.cmpi sge, %13, %c6_i32_27 : i32
      %63 = arith.andi %61, %62 : i1
      %64 = arith.extui %63 : i1 to i32
      %c0_i32_28 = arith.constant 0 : i32
      %65 = arith.cmpi ne, %64, %c0_i32_28 : i32
      scf.if %65 {
        %c6_i32_34 = arith.constant 6 : i32
        %76 = vector.broadcast %c6_i32_34 : i32 to vector<8x256xi32>
        %77 = arith.cmpi eq, %35, %76 : vector<8x256xi32>
        %c6 = arith.constant 6 : index
        %c0_35 = arith.constant 0 : index
        %78 = vector.load %arg3[%c6, %c0_35] : memref<9x256xf32, #tpu.memory_space<vmem>>, vector<1x256xf32>
        %c0_36 = arith.constant 0 : index
        %c0_37 = arith.constant 0 : index
        %79 = vector.load %arg4[%c0_36, %c0_37] : memref<8x256xf32, #tpu.memory_space<vmem>>, vector<8x256xf32>
        %80 = vector.shape_cast %78 : vector<1x256xf32> to vector<1x256xf32>
        %81 = vector.broadcast %80 : vector<1x256xf32> to vector<8x256xf32>
        %82 = arith.select %77, %81, %79 : vector<8x256xi1>, vector<8x256xf32>
        %c0_38 = arith.constant 0 : index
        %c0_39 = arith.constant 0 : index
        %83 = vector.load %arg4[%c0_38, %c0_39] : memref<8x256xf32, #tpu.memory_space<vmem>>, vector<8x256xf32>
        tpu.vector_store %arg4[%c0_38, %c0_39], %82 {strides = array<i32>} : memref<8x256xf32, #tpu.memory_space<vmem>>, vector<8x256xf32>,
      } else {
      }
      %c7_i32 = arith.constant 7 : i32
      %66 = arith.cmpi slt, %7, %c7_i32 : i32
      %c7_i32_29 = arith.constant 7 : i32
      %67 = arith.cmpi sge, %13, %c7_i32_29 : i32
      %68 = arith.andi %66, %67 : i1
      %69 = arith.extui %68 : i1 to i32
      %c0_i32_30 = arith.constant 0 : i32
      %70 = arith.cmpi ne, %69, %c0_i32_30 : i32
      scf.if %70 {
        %c7_i32_34 = arith.constant 7 : i32
        %76 = vector.broadcast %c7_i32_34 : i32 to vector<8x256xi32>
        %77 = arith.cmpi eq, %35, %76 : vector<8x256xi32>
        %c7 = arith.constant 7 : index
        %c0_35 = arith.constant 0 : index
        %78 = vector.load %arg3[%c7, %c0_35] : memref<9x256xf32, #tpu.memory_space<vmem>>, vector<1x256xf32>
        %c0_36 = arith.constant 0 : index
        %c0_37 = arith.constant 0 : index
        %79 = vector.load %arg4[%c0_36, %c0_37] : memref<8x256xf32, #tpu.memory_space<vmem>>, vector<8x256xf32>
        %80 = vector.shape_cast %78 : vector<1x256xf32> to vector<1x256xf32>
        %81 = vector.broadcast %80 : vector<1x256xf32> to vector<8x256xf32>
        %82 = arith.select %77, %81, %79 : vector<8x256xi1>, vector<8x256xf32>
        %c0_38 = arith.constant 0 : index
        %c0_39 = arith.constant 0 : index
        %83 = vector.load %arg4[%c0_38, %c0_39] : memref<8x256xf32, #tpu.memory_space<vmem>>, vector<8x256xf32>
        tpu.vector_store %arg4[%c0_38, %c0_39], %82 {strides = array<i32>} : memref<8x256xf32, #tpu.memory_space<vmem>>, vector<8x256xf32>,
      } else {
      }
      %c8_i32_31 = arith.constant 8 : i32
      %71 = arith.cmpi slt, %7, %c8_i32_31 : i32
      %c8_i32_32 = arith.constant 8 : i32
      %72 = arith.cmpi sge, %13, %c8_i32_32 : i32
      %73 = arith.andi %71, %72 : i1
      %74 = arith.extui %73 : i1 to i32
      %c0_i32_33 = arith.constant 0 : i32
      %75 = arith.cmpi ne, %74, %c0_i32_33 : i32
      scf.if %75 {
        %c8_i32_34 = arith.constant 8 : i32
        %76 = vector.broadcast %c8_i32_34 : i32 to vector<8x256xi32>
        %77 = arith.cmpi eq, %35, %76 : vector<8x256xi32>
        %c8 = arith.constant 8 : index
        %c0_35 = arith.constant 0 : index
        %78 = vector.load %arg3[%c8, %c0_35] : memref<9x256xf32, #tpu.memory_space<vmem>>, vector<1x256xf32>
        %c0_36 = arith.constant 0 : index
        %c0_37 = arith.constant 0 : index
        %79 = vector.load %arg4[%c0_36, %c0_37] : memref<8x256xf32, #tpu.memory_space<vmem>>, vector<8x256xf32>
        %80 = vector.shape_cast %78 : vector<1x256xf32> to vector<1x256xf32>
        %81 = vector.broadcast %80 : vector<1x256xf32> to vector<8x256xf32>
        %82 = arith.select %77, %81, %79 : vector<8x256xi1>, vector<8x256xf32>
        %c0_38 = arith.constant 0 : index
        %c0_39 = arith.constant 0 : index
        %83 = vector.load %arg4[%c0_38, %c0_39] : memref<8x256xf32, #tpu.memory_space<vmem>>, vector<8x256xf32>
        tpu.vector_store %arg4[%c0_38, %c0_39], %82 {strides = array<i32>} : memref<8x256xf32, #tpu.memory_space<vmem>>, vector<8x256xf32>,
      } else {
      }
    } else {
    }
    return
  }
  func.func @transform_0(%arg0: i32, %arg1: i32) -> (i32, i32) {
    %c0_i32 = arith.constant 0 : i32
    %c0_i32_0 = arith.constant 0 : i32
    %c0_i32_1 = arith.constant 0 : i32
    return %c0_i32, %c0_i32_0 : i32, i32
  }
  func.func @transform_1(%arg0: i32, %arg1: i32) -> (i32, i32) {
    %c0_i32 = arith.constant 0 : i32
    %c0_i32_0 = arith.constant 0 : i32
    %c0_i32_1 = arith.constant 0 : i32
    return %c0_i32, %c0_i32_0 : i32, i32
  }
  func.func @transform_2(%arg0: i32, %arg1: i32) -> (i32, i32) {
    %c0_i32 = arith.constant 0 : i32
    return %arg0, %arg1 : i32, i32
  }
}

module attributes {stable_mosaic.version = 11 : i64} {
  func.func @kernel(%arg0: i32, %arg1: i32, %arg2: memref<1x256xi32, #tpu.memory_space<vmem>>, %arg3: memref<9x256xf32, #tpu.memory_space<vmem>>, %arg4: memref<8x256xf32, #tpu.memory_space<vmem>>) attributes {dimension_semantics = [#tpu.dimension_semantics<parallel>, #tpu.dimension_semantics<parallel>], iteration_bounds = array<i64: 1, 1>, scalar_prefetch = 0 : i64, scratch_operands = 0 : i64, tpu.core_type = #tpu.core_type<tc>, window_params = [{pipeline_mode = #tpu.pipeline_mode<synchronous>, transform_indices = @transform_0, window_bounds = array<i64: 1, 256>}, {pipeline_mode = #tpu.pipeline_mode<synchronous>, transform_indices = @transform_1, window_bounds = array<i64: 9, 256>}, {transform_indices = @transform_2, window_bounds = array<i64: 8, 256>}]} {
    %c8_i32 = arith.constant 8 : i32
    %0 = arith.muli %arg0, %c8_i32 : i32
    %c8_i32_0 = arith.constant 8 : i32
    %1 = arith.muli %arg1, %c8_i32_0 : i32
    %c8_i32_1 = arith.constant 8 : i32
    %2 = arith.addi %0, %c8_i32_1 : i32
    %c1_i32 = arith.constant 1 : i32
    %3 = arith.subi %2, %c1_i32 : i32
    %4 = arith.subi %1, %3 : i32
    %c-4_i32 = arith.constant -4 : i32
    %c4_i32 = arith.constant 4 : i32
    %5 = arith.maxsi %c-4_i32, %4 : i32
    %6 = arith.minsi %c4_i32, %5 : i32
    %c4_i32_2 = arith.constant 4 : i32
    %7 = arith.addi %6, %c4_i32_2 : i32
    %c8_i32_3 = arith.constant 8 : i32
    %8 = arith.addi %1, %c8_i32_3 : i32
    %c1_i32_4 = arith.constant 1 : i32
    %9 = arith.subi %8, %c1_i32_4 : i32
    %10 = arith.subi %9, %0 : i32
    %c-4_i32_5 = arith.constant -4 : i32
    %c4_i32_6 = arith.constant 4 : i32
    %11 = arith.maxsi %c-4_i32_5, %10 : i32
    %12 = arith.minsi %c4_i32_6, %11 : i32
    %c4_i32_7 = arith.constant 4 : i32
    %13 = arith.addi %12, %c4_i32_7 : i32
    %14 = arith.index_cast %7 : i32 to index
    %c0 = arith.constant 0 : index
    %15 = vector.load %arg3[%14, %c0] : memref<9x256xf32, #tpu.memory_space<vmem>>, vector<1x256xf32>
    %16 = vector.shape_cast %15 : vector<1x256xf32> to vector<1x256xf32>
    %17 = vector.broadcast %16 : vector<1x256xf32> to vector<8x256xf32>
    %c0_8 = arith.constant 0 : index
    %c0_9 = arith.constant 0 : index
    %18 = vector.load %arg4[%c0_8, %c0_9] : memref<8x256xf32, #tpu.memory_space<vmem>>, vector<8x256xf32>
    tpu.vector_store %arg4[%c0_8, %c0_9], %17 {strides = array<i32>} : memref<8x256xf32, #tpu.memory_space<vmem>>, vector<8x256xf32>,
    %19 = arith.cmpi slt, %7, %13 : i32
    %20 = arith.extui %19 : i1 to i32
    %c0_i32 = arith.constant 0 : i32
    %21 = arith.cmpi ne, %20, %c0_i32 : i32
    scf.if %21 {
      %22 = tpu.iota {dimensions = array<i32: 0>} : vector<8x256xi32>
      %23 = vector.broadcast %0 : i32 to vector<8x256xi32>
      %24 = arith.addi %23, %22 : vector<8x256xi32>
      %c0_10 = arith.constant 0 : index
      %c0_11 = arith.constant 0 : index
      %25 = vector.load %arg2[%c0_10, %c0_11] : memref<1x256xi32, #tpu.memory_space<vmem>>, vector<1x256xi32>
      %26 = vector.broadcast %1 : i32 to vector<1x256xi32>
      %27 = arith.addi %26, %25 : vector<1x256xi32>
      %28 = vector.broadcast %27 : vector<1x256xi32> to vector<8x256xi32>
      %29 = arith.subi %28, %24 : vector<8x256xi32>
      %c-4_i32_12 = arith.constant -4 : i32
      %c4_i32_13 = arith.constant 4 : i32
      %30 = vector.broadcast %c-4_i32_12 : i32 to vector<8x256xi32>
      %31 = arith.maxsi %30, %29 : vector<8x256xi32>
      %32 = vector.broadcast %c4_i32_13 : i32 to vector<8x256xi32>
      %33 = arith.minsi %32, %31 : vector<8x256xi32>
      %c4_i32_14 = arith.constant 4 : i32
      %34 = vector.broadcast %c4_i32_14 : i32 to vector<8x256xi32>
      %35 = arith.addi %33, %34 : vector<8x256xi32>
      %c1_i32_15 = arith.constant 1 : i32
      %36 = arith.cmpi slt, %7, %c1_i32_15 : i32
      %c1_i32_16 = arith.constant 1 : i32
      %37 = arith.cmpi sge, %13, %c1_i32_16 : i32
      %38 = arith.andi %36, %37 : i1
      %39 = arith.extui %38 : i1 to i32
      %c0_i32_17 = arith.constant 0 : i32
      %40 = arith.cmpi ne, %39, %c0_i32_17 : i32
      scf.if %40 {
        %c1_i32_34 = arith.constant 1 : i32
        %76 = vector.broadcast %c1_i32_34 : i32 to vector<8x256xi32>
        %77 = arith.cmpi eq, %35, %76 : vector<8x256xi32>
        %c1 = arith.constant 1 : index
        %c0_35 = arith.constant 0 : index
        %78 = vector.load %arg3[%c1, %c0_35] : memref<9x256xf32, #tpu.memory_space<vmem>>, vector<1x256xf32>
        %c0_36 = arith.constant 0 : index
        %c0_37 = arith.constant 0 : index
        %79 = vector.load %arg4[%c0_36, %c0_37] : memref<8x256xf32, #tpu.memory_space<vmem>>, vector<8x256xf32>
        %80 = vector.shape_cast %78 : vector<1x256xf32> to vector<1x256xf32>
        %81 = vector.broadcast %80 : vector<1x256xf32> to vector<8x256xf32>
        %82 = arith.select %77, %81, %79 : vector<8x256xi1>, vector<8x256xf32>
        %c0_38 = arith.constant 0 : index
        %c0_39 = arith.constant 0 : index
        %83 = vector.load %arg4[%c0_38, %c0_39] : memref<8x256xf32, #tpu.memory_space<vmem>>, vector<8x256xf32>
        tpu.vector_store %arg4[%c0_38, %c0_39], %82 {strides = array<i32>} : memref<8x256xf32, #tpu.memory_space<vmem>>, vector<8x256xf32>,
      } else {
      }
      %c2_i32 = arith.constant 2 : i32
      %41 = arith.cmpi slt, %7, %c2_i32 : i32
      %c2_i32_18 = arith.constant 2 : i32
      %42 = arith.cmpi sge, %13, %c2_i32_18 : i32
      %43 = arith.andi %41, %42 : i1
      %44 = arith.extui %43 : i1 to i32
      %c0_i32_19 = arith.constant 0 : i32
      %45 = arith.cmpi ne, %44, %c0_i32_19 : i32
      scf.if %45 {
        %c2_i32_34 = arith.constant 2 : i32
        %76 = vector.broadcast %c2_i32_34 : i32 to vector<8x256xi32>
        %77 = arith.cmpi eq, %35, %76 : vector<8x256xi32>
        %c2 = arith.constant 2 : index
        %c0_35 = arith.constant 0 : index
        %78 = vector.load %arg3[%c2, %c0_35] : memref<9x256xf32, #tpu.memory_space<vmem>>, vector<1x256xf32>
        %c0_36 = arith.constant 0 : index
        %c0_37 = arith.constant 0 : index
        %79 = vector.load %arg4[%c0_36, %c0_37] : memref<8x256xf32, #tpu.memory_space<vmem>>, vector<8x256xf32>
        %80 = vector.shape_cast %78 : vector<1x256xf32> to vector<1x256xf32>
        %81 = vector.broadcast %80 : vector<1x256xf32> to vector<8x256xf32>
        %82 = arith.select %77, %81, %79 : vector<8x256xi1>, vector<8x256xf32>
        %c0_38 = arith.constant 0 : index
        %c0_39 = arith.constant 0 : index
        %83 = vector.load %arg4[%c0_38, %c0_39] : memref<8x256xf32, #tpu.memory_space<vmem>>, vector<8x256xf32>
        tpu.vector_store %arg4[%c0_38, %c0_39], %82 {strides = array<i32>} : memref<8x256xf32, #tpu.memory_space<vmem>>, vector<8x256xf32>,
      } else {
      }
      %c3_i32 = arith.constant 3 : i32
      %46 = arith.cmpi slt, %7, %c3_i32 : i32
      %c3_i32_20 = arith.constant 3 : i32
      %47 = arith.cmpi sge, %13, %c3_i32_20 : i32
      %48 = arith.andi %46, %47 : i1
      %49 = arith.extui %48 : i1 to i32
      %c0_i32_21 = arith.constant 0 : i32
      %50 = arith.cmpi ne, %49, %c0_i32_21 : i32
      scf.if %50 {
        %c3_i32_34 = arith.constant 3 : i32
        %76 = vector.broadcast %c3_i32_34 : i32 to vector<8x256xi32>
        %77 = arith.cmpi eq, %35, %76 : vector<8x256xi32>
        %c3 = arith.constant 3 : index
        %c0_35 = arith.constant 0 : index
        %78 = vector.load %arg3[%c3, %c0_35] : memref<9x256xf32, #tpu.memory_space<vmem>>, vector<1x256xf32>
        %c0_36 = arith.constant 0 : index
        %c0_37 = arith.constant 0 : index
        %79 = vector.load %arg4[%c0_36, %c0_37] : memref<8x256xf32, #tpu.memory_space<vmem>>, vector<8x256xf32>
        %80 = vector.shape_cast %78 : vector<1x256xf32> to vector<1x256xf32>
        %81 = vector.broadcast %80 : vector<1x256xf32> to vector<8x256xf32>
        %82 = arith.select %77, %81, %79 : vector<8x256xi1>, vector<8x256xf32>
        %c0_38 = arith.constant 0 : index
        %c0_39 = arith.constant 0 : index
        %83 = vector.load %arg4[%c0_38, %c0_39] : memref<8x256xf32, #tpu.memory_space<vmem>>, vector<8x256xf32>
        tpu.vector_store %arg4[%c0_38, %c0_39], %82 {strides = array<i32>} : memref<8x256xf32, #tpu.memory_space<vmem>>, vector<8x256xf32>,
      } else {
      }
      %c4_i32_22 = arith.constant 4 : i32
      %51 = arith.cmpi slt, %7, %c4_i32_22 : i32
      %c4_i32_23 = arith.constant 4 : i32
      %52 = arith.cmpi sge, %13, %c4_i32_23 : i32
      %53 = arith.andi %51, %52 : i1
      %54 = arith.extui %53 : i1 to i32
      %c0_i32_24 = arith.constant 0 : i32
      %55 = arith.cmpi ne, %54, %c0_i32_24 : i32
      scf.if %55 {
        %c4_i32_34 = arith.constant 4 : i32
        %76 = vector.broadcast %c4_i32_34 : i32 to vector<8x256xi32>
        %77 = arith.cmpi eq, %35, %76 : vector<8x256xi32>
        %c4 = arith.constant 4 : index
        %c0_35 = arith.constant 0 : index
        %78 = vector.load %arg3[%c4, %c0_35] : memref<9x256xf32, #tpu.memory_space<vmem>>, vector<1x256xf32>
        %c0_36 = arith.constant 0 : index
        %c0_37 = arith.constant 0 : index
        %79 = vector.load %arg4[%c0_36, %c0_37] : memref<8x256xf32, #tpu.memory_space<vmem>>, vector<8x256xf32>
        %80 = vector.shape_cast %78 : vector<1x256xf32> to vector<1x256xf32>
        %81 = vector.broadcast %80 : vector<1x256xf32> to vector<8x256xf32>
        %82 = arith.select %77, %81, %79 : vector<8x256xi1>, vector<8x256xf32>
        %c0_38 = arith.constant 0 : index
        %c0_39 = arith.constant 0 : index
        %83 = vector.load %arg4[%c0_38, %c0_39] : memref<8x256xf32, #tpu.memory_space<vmem>>, vector<8x256xf32>
        tpu.vector_store %arg4[%c0_38, %c0_39], %82 {strides = array<i32>} : memref<8x256xf32, #tpu.memory_space<vmem>>, vector<8x256xf32>,
      } else {
      }
      %c5_i32 = arith.constant 5 : i32
      %56 = arith.cmpi slt, %7, %c5_i32 : i32
      %c5_i32_25 = arith.constant 5 : i32
      %57 = arith.cmpi sge, %13, %c5_i32_25 : i32
      %58 = arith.andi %56, %57 : i1
      %59 = arith.extui %58 : i1 to i32
      %c0_i32_26 = arith.constant 0 : i32
      %60 = arith.cmpi ne, %59, %c0_i32_26 : i32
      scf.if %60 {
        %c5_i32_34 = arith.constant 5 : i32
        %76 = vector.broadcast %c5_i32_34 : i32 to vector<8x256xi32>
        %77 = arith.cmpi eq, %35, %76 : vector<8x256xi32>
        %c5 = arith.constant 5 : index
        %c0_35 = arith.constant 0 : index
        %78 = vector.load %arg3[%c5, %c0_35] : memref<9x256xf32, #tpu.memory_space<vmem>>, vector<1x256xf32>
        %c0_36 = arith.constant 0 : index
        %c0_37 = arith.constant 0 : index
        %79 = vector.load %arg4[%c0_36, %c0_37] : memref<8x256xf32, #tpu.memory_space<vmem>>, vector<8x256xf32>
        %80 = vector.shape_cast %78 : vector<1x256xf32> to vector<1x256xf32>
        %81 = vector.broadcast %80 : vector<1x256xf32> to vector<8x256xf32>
        %82 = arith.select %77, %81, %79 : vector<8x256xi1>, vector<8x256xf32>
        %c0_38 = arith.constant 0 : index
        %c0_39 = arith.constant 0 : index
        %83 = vector.load %arg4[%c0_38, %c0_39] : memref<8x256xf32, #tpu.memory_space<vmem>>, vector<8x256xf32>
        tpu.vector_store %arg4[%c0_38, %c0_39], %82 {strides = array<i32>} : memref<8x256xf32, #tpu.memory_space<vmem>>, vector<8x256xf32>,
      } else {
      }
      %c6_i32 = arith.constant 6 : i32
      %61 = arith.cmpi slt, %7, %c6_i32 : i32
      %c6_i32_27 = arith.constant 6 : i32
      %62 = arith.cmpi sge, %13, %c6_i32_27 : i32
      %63 = arith.andi %61, %62 : i1
      %64 = arith.extui %63 : i1 to i32
      %c0_i32_28 = arith.constant 0 : i32
      %65 = arith.cmpi ne, %64, %c0_i32_28 : i32
      scf.if %65 {
        %c6_i32_34 = arith.constant 6 : i32
        %76 = vector.broadcast %c6_i32_34 : i32 to vector<8x256xi32>
        %77 = arith.cmpi eq, %35, %76 : vector<8x256xi32>
        %c6 = arith.constant 6 : index
        %c0_35 = arith.constant 0 : index
        %78 = vector.load %arg3[%c6, %c0_35] : memref<9x256xf32, #tpu.memory_space<vmem>>, vector<1x256xf32>
        %c0_36 = arith.constant 0 : index
        %c0_37 = arith.constant 0 : index
        %79 = vector.load %arg4[%c0_36, %c0_37] : memref<8x256xf32, #tpu.memory_space<vmem>>, vector<8x256xf32>
        %80 = vector.shape_cast %78 : vector<1x256xf32> to vector<1x256xf32>
        %81 = vector.broadcast %80 : vector<1x256xf32> to vector<8x256xf32>
        %82 = arith.select %77, %81, %79 : vector<8x256xi1>, vector<8x256xf32>
        %c0_38 = arith.constant 0 : index
        %c0_39 = arith.constant 0 : index
        %83 = vector.load %arg4[%c0_38, %c0_39] : memref<8x256xf32, #tpu.memory_space<vmem>>, vector<8x256xf32>
        tpu.vector_store %arg4[%c0_38, %c0_39], %82 {strides = array<i32>} : memref<8x256xf32, #tpu.memory_space<vmem>>, vector<8x256xf32>,
      } else {
      }
      %c7_i32 = arith.constant 7 : i32
      %66 = arith.cmpi slt, %7, %c7_i32 : i32
      %c7_i32_29 = arith.constant 7 : i32
      %67 = arith.cmpi sge, %13, %c7_i32_29 : i32
      %68 = arith.andi %66, %67 : i1
      %69 = arith.extui %68 : i1 to i32
      %c0_i32_30 = arith.constant 0 : i32
      %70 = arith.cmpi ne, %69, %c0_i32_30 : i32
      scf.if %70 {
        %c7_i32_34 = arith.constant 7 : i32
        %76 = vector.broadcast %c7_i32_34 : i32 to vector<8x256xi32>
        %77 = arith.cmpi eq, %35, %76 : vector<8x256xi32>
        %c7 = arith.constant 7 : index
        %c0_35 = arith.constant 0 : index
        %78 = vector.load %arg3[%c7, %c0_35] : memref<9x256xf32, #tpu.memory_space<vmem>>, vector<1x256xf32>
        %c0_36 = arith.constant 0 : index
        %c0_37 = arith.constant 0 : index
        %79 = vector.load %arg4[%c0_36, %c0_37] : memref<8x256xf32, #tpu.memory_space<vmem>>, vector<8x256xf32>
        %80 = vector.shape_cast %78 : vector<1x256xf32> to vector<1x256xf32>
        %81 = vector.broadcast %80 : vector<1x256xf32> to vector<8x256xf32>
        %82 = arith.select %77, %81, %79 : vector<8x256xi1>, vector<8x256xf32>
        %c0_38 = arith.constant 0 : index
        %c0_39 = arith.constant 0 : index
        %83 = vector.load %arg4[%c0_38, %c0_39] : memref<8x256xf32, #tpu.memory_space<vmem>>, vector<8x256xf32>
        tpu.vector_store %arg4[%c0_38, %c0_39], %82 {strides = array<i32>} : memref<8x256xf32, #tpu.memory_space<vmem>>, vector<8x256xf32>,
      } else {
      }
      %c8_i32_31 = arith.constant 8 : i32
      %71 = arith.cmpi slt, %7, %c8_i32_31 : i32
      %c8_i32_32 = arith.constant 8 : i32
      %72 = arith.cmpi sge, %13, %c8_i32_32 : i32
      %73 = arith.andi %71, %72 : i1
      %74 = arith.extui %73 : i1 to i32
      %c0_i32_33 = arith.constant 0 : i32
      %75 = arith.cmpi ne, %74, %c0_i32_33 : i32
      scf.if %75 {
        %c8_i32_34 = arith.constant 8 : i32
        %76 = vector.broadcast %c8_i32_34 : i32 to vector<8x256xi32>
        %77 = arith.cmpi eq, %35, %76 : vector<8x256xi32>
        %c8 = arith.constant 8 : index
        %c0_35 = arith.constant 0 : index
        %78 = vector.load %arg3[%c8, %c0_35] : memref<9x256xf32, #tpu.memory_space<vmem>>, vector<1x256xf32>
        %c0_36 = arith.constant 0 : index
        %c0_37 = arith.constant 0 : index
        %79 = vector.load %arg4[%c0_36, %c0_37] : memref<8x256xf32, #tpu.memory_space<vmem>>, vector<8x256xf32>
        %80 = vector.shape_cast %78 : vector<1x256xf32> to vector<1x256xf32>
        %81 = vector.broadcast %80 : vector<1x256xf32> to vector<8x256xf32>
        %82 = arith.select %77, %81, %79 : vector<8x256xi1>, vector<8x256xf32>
        %c0_38 = arith.constant 0 : index
        %c0_39 = arith.constant 0 : index
        %83 = vector.load %arg4[%c0_38, %c0_39] : memref<8x256xf32, #tpu.memory_space<vmem>>, vector<8x256xf32>
        tpu.vector_store %arg4[%c0_38, %c0_39], %82 {strides = array<i32>} : memref<8x256xf32, #tpu.memory_space<vmem>>, vector<8x256xf32>,
      } else {
      }
    } else {
    }
    return
  }
  func.func @transform_0(%arg0: i32, %arg1: i32) -> (i32, i32) {
    %c0_i32 = arith.constant 0 : i32
    %c0_i32_0 = arith.constant 0 : i32
    %c0_i32_1 = arith.constant 0 : i32
    return %c0_i32, %c0_i32_0 : i32, i32
  }
  func.func @transform_1(%arg0: i32, %arg1: i32) -> (i32, i32) {
    %c0_i32 = arith.constant 0 : i32
    %c0_i32_0 = arith.constant 0 : i32
    %c0_i32_1 = arith.constant 0 : i32
    return %c0_i32, %c0_i32_0 : i32, i32
  }
  func.func @transform_2(%arg0: i32, %arg1: i32) -> (i32, i32) {
    %c0_i32 = arith.constant 0 : i32
    return %arg0, %arg1 : i32, i32
  }
}

</mosaic_0001>

<llo_original>
// kernel: tpu_custom_call.1
$region0: #{tpu_custom_call.1}
  #allocation0 [shape = 'u32[]', space=smem, size = 0x4, offset = 0x4, fixed_abs, tag = 'smem constant byte address 0x4 - core index']
  #allocation1 [shape = 'u32[144,128]{1,0:T(1,128)}', space=vmem, size = 0x12000, scoped, tag = 'internal scratch']
  %s0 = inlined_call_operand.hbm [shape: s32[1,256], index: 0, kind: input, shape index: {}]
  %s1 = inlined_call_operand.hbm [shape: f32[9,256], index: 1, kind: input, shape index: {}]
  %s2 = inlined_call_operand.hbm [shape: f32[8,256], index: 2, kind: output, shape index: {}]
  %s3 = sld [smem:[#allocation0]]
  $region62: #{tpu_custom_call.1} parent=0
    _
  %s5 = ssub.s32 1, %s3
  %s6 = scalar_select 0, %s5, %s3
  $region1: #{tpu_custom_call.1} parent=0
    #allocation2 [shape = 'u8[1024]{0}', space=vmem, size = 0x400, scoped, tag = 'input window, operand 0, single buffered']
    #allocation3 [shape = 's32[1]{0}', space=sflag, size = 0x4, scoped, tag = 'scoped memory for tpu_custom_call.1']
    #allocation4 [shape = 's32[1]{0}', space=sflag, size = 0x4, scoped, tag = 'scoped memory for tpu_custom_call.1']
    #allocation5 [shape = 'u8[16384]{0}', space=vmem, size = 0x4000, scoped, tag = 'input window, operand 1, single buffered']
    #allocation6 [shape = 's32[1]{0}', space=sflag, size = 0x4, scoped, tag = 'scoped memory for tpu_custom_call.1']
    #allocation7 [shape = 'u8[8192]{0}', space=vmem, size = 0x2000, scoped, tag = 'output window, operand 0, single buffered']
    %7 = vsyncpa [#allocation3], 0
    %8 = vsyncpa [#allocation6], 0
    %9 = vsyncpa [#allocation4], 0
    // Predicated region
    $region2: #{tpu_custom_call.1} parent=1 // pred_check
      _
    $region3: #{tpu_custom_call.1} parent=1 // pred_check_branch
      %11 = sbr.rel (0) target = $region5
    $region4: #{tpu_custom_call.1} parent=1 // pred_region
      %s13 = ssub.s32 32, 32
      %14 = vsyncadd [#allocation3], %s13
      %s16 = sshll.u32 [#allocation2], 4
      %s17 = int_to_ptr.vmem [resolvable:$true] %s16
      %19 = dma.hbm_to_vmem [thread:$0]  %s0, 32, %s17, [#allocation3]
    $region5: #{tpu_custom_call.1} parent=1 // pred_fallthru
      _
    // Predicated region
    $region6: #{tpu_custom_call.1} parent=1 // pred_check
      _
    $region7: #{tpu_custom_call.1} parent=1 // pred_check_branch
      %21 = sbr.rel (0) target = $region9
    $region8: #{tpu_custom_call.1} parent=1 // pred_region
      %s23 = ssub.s32 512, 512
      %24 = vsyncadd [#allocation6], %s23
      %s25 = sshll.u32 [#allocation5], 4
      %s26 = int_to_ptr.vmem [resolvable:$true] %s25
      %31 = dma.hbm_to_vmem [thread:$0]  %s1, 512, %s26, [#allocation6], 256, 256, 16
    $region9: #{tpu_custom_call.1} parent=1 // pred_fallthru
      _
    // Predicated region
    $region10: #{tpu_custom_call.1} parent=1 // pred_check
      _
    $region11: #{tpu_custom_call.1} parent=1 // pred_check_branch
      %33 = sbr.rel (0) target = $region13
    $region12: #{tpu_custom_call.1} parent=1 // pred_region
      %34 = dma.done [#allocation3], 32
    $region13: #{tpu_custom_call.1} parent=1 // pred_fallthru
      _
    // Predicated region
    $region14: #{tpu_custom_call.1} parent=1 // pred_check
      _
    $region15: #{tpu_custom_call.1} parent=1 // pred_check_branch
      %36 = sbr.rel (0) target = $region17
    $region16: #{tpu_custom_call.1} parent=1 // pred_region
      %37 = dma.done [#allocation6], 512
    $region17: #{tpu_custom_call.1} parent=1 // pred_fallthru
      _
    %s38 = smul.u32 0, 8
    %s39 = smul.u32 0, 8
    %s40 = sadd.s32 %s38, 7
    %s41 = ssub.s32 %s39, %s40
    %p42 = scmp.gt.s32.totalorder %s41, 4294967292
    %s43 = scalar_select %p42, %s41, 4294967292
    %p44 = scmp.lt.s32.totalorder %s43, 4
    %s45 = scalar_select %p44, %s43, 4
    %s46 = sadd.s32 %s45, 4
    %s47 = sadd.s32 %s39, 7
    %s48 = ssub.s32 %s47, %s38
    %p49 = scmp.gt.s32.totalorder %s48, 4294967292
    %s50 = scalar_select %p49, %s48, 4294967292
    %p51 = scmp.lt.s32.totalorder %s50, 4
    %s52 = scalar_select %p51, %s50, 4
    %s53 = sadd.s32 %s52, 4
    %s54 = sshra.s32 %s46, 3
    %s55 = sand.u32 %s46, 7
    %s56 = sshra.s32 %s46, 3
    %s57 = sand.u32 %s46, 7
    %s58 = smul.u32 %s54, 2
    %s59 = smul.u32 %s58, 8
    %s60 = sadd.s32 %s59, %s57
    %s61 = scalar_lea.vmem [#allocation5], %s60
    %v62 = vld [vmem:[%s61] ss:$8 sm:$0x3]
    %v64 = vlaneseq
    %v65 = vshrl.u32 %v64, 7
    %v66 = vsub.s32 0, %v65
    %v67 = vrot.slane %v62, %v66
    %v68 = vlaneseq
    %v69 = vshrl.u32 %v68, 7
    %v70 = vsub.s32 1, %v69
    %v71 = vrot.slane %v62, %v70
    %74 = vst [vmem:[#allocation7] sm:$0xff] %v67
    %75 = vst [vmem:[#allocation7 + $0x8] sm:$0xff] %v71
    %p76 = scmp.lt.s32.totalorder %s46, %s53
    // Predicated region
    $region18: #{tpu_custom_call.1} parent=1 // pred_check
      %p77 = pneg %p76
    $region19: #{tpu_custom_call.1} parent=1 // pred_check_branch
      %79 = sbr.rel (%p77) target = $region21
    $region20: #{tpu_custom_call.1} parent=1 // pred_region
      %v80 = vlaneseq
      %v81 = vshrl.u32 %v80, 7
      %v82 = vstv %s38
      %v83 = vadd.s32 %v82, %v81
      %v84 = vld [vmem:[#allocation2] sm:$0x3]
      %v85 = vstv %s39
      %v86 = vadd.s32 %v85, %v84
      %v87 = vlaneseq
      %v88 = vshrl.u32 %v87, 7
      %v89 = vsub.s32 0, %v88
      %v90 = vrot.slane %v86, %v89
      %v91 = vlaneseq
      %v92 = vshrl.u32 %v91, 7
      %v93 = vsub.s32 1, %v92
      %v94 = vrot.slane %v86, %v93
      %v95 = vsub.s32 %v90, %v83
      %v96 = vsub.s32 %v94, %v83
      %vm97 = vcmp.gt.s32.totalorder %v95, 4294967292
      %v98 = vsel %vm97, %v95, 4294967292
      %vm99 = vcmp.gt.s32.totalorder %v96, 4294967292
      %v100 = vsel %vm99, %v96, 4294967292
      %vm101 = vcmp.lt.s32.totalorder %v98, 4
      %v102 = vsel %vm101, %v98, 4
      %vm103 = vcmp.lt.s32.totalorder %v100, 4
      %v104 = vsel %vm103, %v100, 4
      %v105 = vadd.s32 %v102, 4
      %v106 = vadd.s32 %v104, 4
      %p107 = scmp.lt.s32.totalorder %s46, 1
      %p108 = scmp.ge.s32.totalorder %s53, 1
      %p109 = pnand %p107, %p108
      %p110 = pneg %p109
      // Predicated region
      $region22: #{tpu_custom_call.1} parent=20 // pred_check
        _
      $region23: #{tpu_custom_call.1} parent=20 // pred_check_branch
        %112 = sbr.rel (%p109) target = $region25
      $region24: #{tpu_custom_call.1} parent=20 // pred_region
        %vm113 = vcmp.eq.s32.totalorder %v105, 1
        %vm114 = vcmp.eq.s32.totalorder %v106, 1
        %s115 = scalar_lea.vmem [#allocation5], 1
        %v116 = vld [vmem:[%s115] ss:$8 sm:$0x3]
        %v117 = vld [vmem:[#allocation7] sm:$0xff]
        %v118 = vld [vmem:[#allocation7 + $0x8] sm:$0xff]
        %v120 = vlaneseq
        %v121 = vshrl.u32 %v120, 7
        %v122 = vsub.s32 0, %v121
        %v123 = vrot.slane %v116, %v122
        %v124 = vlaneseq
        %v125 = vshrl.u32 %v124, 7
        %v126 = vsub.s32 1, %v125
        %v127 = vrot.slane %v116, %v126
        %v130 = vsel %vm113, %v123, %v117
        %v131 = vsel %vm114, %v127, %v118
        %132 = vst [vmem:[#allocation7] sm:$0xff] %v130
        %133 = vst [vmem:[#allocation7 + $0x8] sm:$0xff] %v131
      $region25: #{tpu_custom_call.1} parent=20 // pred_fallthru
        _
      %p134 = scmp.lt.s32.totalorder %s46, 2
      %p135 = scmp.ge.s32.totalorder %s53, 2
      %p136 = pnand %p134, %p135
      %p137 = pneg %p136
      // Predicated region
      $region26: #{tpu_custom_call.1} parent=20 // pred_check
        _
      $region27: #{tpu_custom_call.1} parent=20 // pred_check_branch
        %139 = sbr.rel (%p136) target = $region29
      $region28: #{tpu_custom_call.1} parent=20 // pred_region
        %vm140 = vcmp.eq.s32.totalorder %v105, 2
        %vm141 = vcmp.eq.s32.totalorder %v106, 2
        %s142 = scalar_lea.vmem [#allocation5], 2
        %v143 = vld [vmem:[%s142] ss:$8 sm:$0x3]
        %v144 = vld [vmem:[#allocation7] sm:$0xff]
        %v145 = vld [vmem:[#allocation7 + $0x8] sm:$0xff]
        %v147 = vlaneseq
        %v148 = vshrl.u32 %v147, 7
        %v149 = vsub.s32 0, %v148
        %v150 = vrot.slane %v143, %v149
        %v151 = vlaneseq
        %v152 = vshrl.u32 %v151, 7
        %v153 = vsub.s32 1, %v152
        %v154 = vrot.slane %v143, %v153
        %v157 = vsel %vm140, %v150, %v144
        %v158 = vsel %vm141, %v154, %v145
        %159 = vst [vmem:[#allocation7] sm:$0xff] %v157
        %160 = vst [vmem:[#allocation7 + $0x8] sm:$0xff] %v158
      $region29: #{tpu_custom_call.1} parent=20 // pred_fallthru
        _
      %p161 = scmp.lt.s32.totalorder %s46, 3
      %p162 = scmp.ge.s32.totalorder %s53, 3
      %p163 = pnand %p161, %p162
      %p164 = pneg %p163
      // Predicated region
      $region30: #{tpu_custom_call.1} parent=20 // pred_check
        _
      $region31: #{tpu_custom_call.1} parent=20 // pred_check_branch
        %166 = sbr.rel (%p163) target = $region33
      $region32: #{tpu_custom_call.1} parent=20 // pred_region
        %vm167 = vcmp.eq.s32.totalorder %v105, 3
        %vm168 = vcmp.eq.s32.totalorder %v106, 3
        %s169 = scalar_lea.vmem [#allocation5], 3
        %v170 = vld [vmem:[%s169] ss:$8 sm:$0x3]
        %v171 = vld [vmem:[#allocation7] sm:$0xff]
        %v172 = vld [vmem:[#allocation7 + $0x8] sm:$0xff]
        %v174 = vlaneseq
        %v175 = vshrl.u32 %v174, 7
        %v176 = vsub.s32 0, %v175
        %v177 = vrot.slane %v170, %v176
        %v178 = vlaneseq
        %v179 = vshrl.u32 %v178, 7
        %v180 = vsub.s32 1, %v179
        %v181 = vrot.slane %v170, %v180
        %v184 = vsel %vm167, %v177, %v171
        %v185 = vsel %vm168, %v181, %v172
        %186 = vst [vmem:[#allocation7] sm:$0xff] %v184
        %187 = vst [vmem:[#allocation7 + $0x8] sm:$0xff] %v185
      $region33: #{tpu_custom_call.1} parent=20 // pred_fallthru
        _
      %p188 = scmp.lt.s32.totalorder %s46, 4
      %p189 = scmp.ge.s32.totalorder %s53, 4
      %p190 = pnand %p188, %p189
      %p191 = pneg %p190
      // Predicated region
      $region34: #{tpu_custom_call.1} parent=20 // pred_check
        _
      $region35: #{tpu_custom_call.1} parent=20 // pred_check_branch
        %193 = sbr.rel (%p190) target = $region37
      $region36: #{tpu_custom_call.1} parent=20 // pred_region
        %vm194 = vcmp.eq.s32.totalorder %v105, 4
        %vm195 = vcmp.eq.s32.totalorder %v106, 4
        %s196 = scalar_lea.vmem [#allocation5], 4
        %v197 = vld [vmem:[%s196] ss:$8 sm:$0x3]
        %v198 = vld [vmem:[#allocation7] sm:$0xff]
        %v199 = vld [vmem:[#allocation7 + $0x8] sm:$0xff]
        %v201 = vlaneseq
        %v202 = vshrl.u32 %v201, 7
        %v203 = vsub.s32 0, %v202
        %v204 = vrot.slane %v197, %v203
        %v205 = vlaneseq
        %v206 = vshrl.u32 %v205, 7
        %v207 = vsub.s32 1, %v206
        %v208 = vrot.slane %v197, %v207
        %v211 = vsel %vm194, %v204, %v198
        %v212 = vsel %vm195, %v208, %v199
        %213 = vst [vmem:[#allocation7] sm:$0xff] %v211
        %214 = vst [vmem:[#allocation7 + $0x8] sm:$0xff] %v212
      $region37: #{tpu_custom_call.1} parent=20 // pred_fallthru
        _
      %p215 = scmp.lt.s32.totalorder %s46, 5
      %p216 = scmp.ge.s32.totalorder %s53, 5
      %p217 = pnand %p215, %p216
      %p218 = pneg %p217
      // Predicated region
      $region38: #{tpu_custom_call.1} parent=20 // pred_check
        _
      $region39: #{tpu_custom_call.1} parent=20 // pred_check_branch
        %220 = sbr.rel (%p217) target = $region41
      $region40: #{tpu_custom_call.1} parent=20 // pred_region
        %vm221 = vcmp.eq.s32.totalorder %v105, 5
        %vm222 = vcmp.eq.s32.totalorder %v106, 5
        %s223 = scalar_lea.vmem [#allocation5], 5
        %v224 = vld [vmem:[%s223] ss:$8 sm:$0x3]
        %v225 = vld [vmem:[#allocation7] sm:$0xff]
        %v226 = vld [vmem:[#allocation7 + $0x8] sm:$0xff]
        %v228 = vlaneseq
        %v229 = vshrl.u32 %v228, 7
        %v230 = vsub.s32 0, %v229
        %v231 = vrot.slane %v224, %v230
        %v232 = vlaneseq
        %v233 = vshrl.u32 %v232, 7
        %v234 = vsub.s32 1, %v233
        %v235 = vrot.slane %v224, %v234
        %v238 = vsel %vm221, %v231, %v225
        %v239 = vsel %vm222, %v235, %v226
        %240 = vst [vmem:[#allocation7] sm:$0xff] %v238
        %241 = vst [vmem:[#allocation7 + $0x8] sm:$0xff] %v239
      $region41: #{tpu_custom_call.1} parent=20 // pred_fallthru
        _
      %p242 = scmp.lt.s32.totalorder %s46, 6
      %p243 = scmp.ge.s32.totalorder %s53, 6
      %p244 = pnand %p242, %p243
      %p245 = pneg %p244
      // Predicated region
      $region42: #{tpu_custom_call.1} parent=20 // pred_check
        _
      $region43: #{tpu_custom_call.1} parent=20 // pred_check_branch
        %247 = sbr.rel (%p244) target = $region45
      $region44: #{tpu_custom_call.1} parent=20 // pred_region
        %vm248 = vcmp.eq.s32.totalorder %v105, 6
        %vm249 = vcmp.eq.s32.totalorder %v106, 6
        %s250 = scalar_lea.vmem [#allocation5], 6
        %v251 = vld [vmem:[%s250] ss:$8 sm:$0x3]
        %v252 = vld [vmem:[#allocation7] sm:$0xff]
        %v253 = vld [vmem:[#allocation7 + $0x8] sm:$0xff]
        %v255 = vlaneseq
        %v256 = vshrl.u32 %v255, 7
        %v257 = vsub.s32 0, %v256
        %v258 = vrot.slane %v251, %v257
        %v259 = vlaneseq
        %v260 = vshrl.u32 %v259, 7
        %v261 = vsub.s32 1, %v260
        %v262 = vrot.slane %v251, %v261
        %v265 = vsel %vm248, %v258, %v252
        %v266 = vsel %vm249, %v262, %v253
        %267 = vst [vmem:[#allocation7] sm:$0xff] %v265
        %268 = vst [vmem:[#allocation7 + $0x8] sm:$0xff] %v266
      $region45: #{tpu_custom_call.1} parent=20 // pred_fallthru
        _
      %p269 = scmp.lt.s32.totalorder %s46, 7
      %p270 = scmp.ge.s32.totalorder %s53, 7
      %p271 = pnand %p269, %p270
      %p272 = pneg %p271
      // Predicated region
      $region46: #{tpu_custom_call.1} parent=20 // pred_check
        _
      $region47: #{tpu_custom_call.1} parent=20 // pred_check_branch
        %274 = sbr.rel (%p271) target = $region49
      $region48: #{tpu_custom_call.1} parent=20 // pred_region
        %vm275 = vcmp.eq.s32.totalorder %v105, 7
        %vm276 = vcmp.eq.s32.totalorder %v106, 7
        %s277 = scalar_lea.vmem [#allocation5], 7
        %v278 = vld [vmem:[%s277] ss:$8 sm:$0x3]
        %v279 = vld [vmem:[#allocation7] sm:$0xff]
        %v280 = vld [vmem:[#allocation7 + $0x8] sm:$0xff]
        %v282 = vlaneseq
        %v283 = vshrl.u32 %v282, 7
        %v284 = vsub.s32 0, %v283
        %v285 = vrot.slane %v278, %v284
        %v286 = vlaneseq
        %v287 = vshrl.u32 %v286, 7
        %v288 = vsub.s32 1, %v287
        %v289 = vrot.slane %v278, %v288
        %v292 = vsel %vm275, %v285, %v279
        %v293 = vsel %vm276, %v289, %v280
        %294 = vst [vmem:[#allocation7] sm:$0xff] %v292
        %295 = vst [vmem:[#allocation7 + $0x8] sm:$0xff] %v293
      $region49: #{tpu_custom_call.1} parent=20 // pred_fallthru
        _
      %p296 = scmp.lt.s32.totalorder %s46, 8
      %p297 = scmp.ge.s32.totalorder %s53, 8
      %p298 = pnand %p296, %p297
      %p299 = pneg %p298
      // Predicated region
      $region50: #{tpu_custom_call.1} parent=20 // pred_check
        _
      $region51: #{tpu_custom_call.1} parent=20 // pred_check_branch
        %301 = sbr.rel (%p298) target = $region53
      $region52: #{tpu_custom_call.1} parent=20 // pred_region
        %vm302 = vcmp.eq.s32.totalorder %v105, 8
        %vm303 = vcmp.eq.s32.totalorder %v106, 8
        %s304 = scalar_lea.vmem [#allocation5], 16
        %v305 = vld [vmem:[%s304] ss:$8 sm:$0x3]
        %v306 = vld [vmem:[#allocation7] sm:$0xff]
        %v307 = vld [vmem:[#allocation7 + $0x8] sm:$0xff]
        %v309 = vlaneseq
        %v310 = vshrl.u32 %v309, 7
        %v311 = vsub.s32 0, %v310
        %v312 = vrot.slane %v305, %v311
        %v313 = vlaneseq
        %v314 = vshrl.u32 %v313, 7
        %v315 = vsub.s32 1, %v314
        %v316 = vrot.slane %v305, %v315
        %v319 = vsel %vm302, %v312, %v306
        %v320 = vsel %vm303, %v316, %v307
        %321 = vst [vmem:[#allocation7] sm:$0xff] %v319
        %322 = vst [vmem:[#allocation7 + $0x8] sm:$0xff] %v320
      $region53: #{tpu_custom_call.1} parent=20 // pred_fallthru
        _
    $region21: #{tpu_custom_call.1} parent=1 // pred_fallthru
      _
    // Predicated region
    $region54: #{tpu_custom_call.1} parent=1 // pred_check
      _
    $region55: #{tpu_custom_call.1} parent=1 // pred_check_branch
      %324 = sbr.rel (0) target = $region57
    $region56: #{tpu_custom_call.1} parent=1 // pred_region
      %s326 = ssub.s32 256, 256
      %327 = vsyncadd [#allocation4], %s326
      %s329 = sshll.u32 [#allocation7], 4
      %s330 = int_to_ptr.vmem [resolvable:$true] %s329
      %332 = dma.vmem_to_hbm [thread:$0]  %s330, 256, %s2, [#allocation4]
    $region57: #{tpu_custom_call.1} parent=1 // pred_fallthru
      _
    // Predicated region
    $region58: #{tpu_custom_call.1} parent=1 // pred_check
      _
    $region59: #{tpu_custom_call.1} parent=1 // pred_check_branch
      %334 = sbr.rel (0) target = $region61
    $region60: #{tpu_custom_call.1} parent=1 // pred_region
      %335 = dma.done [#allocation4], 256
    $region61: #{tpu_custom_call.1} parent=1 // pred_fallthru
      _
    %336 = vsyncpa [#allocation3], 1
    %337 = vsyncpa [#allocation6], 1
    %338 = vsyncpa [#allocation4], 1

// kernel: tpu_custom_call.1
$region0: #{tpu_custom_call.1}
  #allocation0 [shape = 'u32[]', space=smem, size = 0x4, offset = 0x4, fixed_abs, tag = 'smem constant byte address 0x4 - core index']
  #allocation1 [shape = 'u32[144,128]{1,0:T(1,128)}', space=vmem, size = 0x12000, scoped, tag = 'internal scratch']
  %s0 = inlined_call_operand.hbm [shape: s32[1,256], index: 0, kind: input, shape index: {}]
  %s1 = inlined_call_operand.hbm [shape: f32[9,256], index: 1, kind: input, shape index: {}]
  %s2 = inlined_call_operand.hbm [shape: f32[8,256], index: 2, kind: output, shape index: {}]
  %s3 = sld [smem:[#allocation0]]
  $region62: #{tpu_custom_call.1} parent=0
    _
  %s5 = ssub.s32 1, %s3
  %s6 = scalar_select 0, %s5, %s3
  $region1: #{tpu_custom_call.1} parent=0
    #allocation2 [shape = 'u8[1024]{0}', space=vmem, size = 0x400, scoped, tag = 'input window, operand 0, single buffered']
    #allocation3 [shape = 's32[1]{0}', space=sflag, size = 0x4, scoped, tag = 'scoped memory for tpu_custom_call.1']
    #allocation4 [shape = 's32[1]{0}', space=sflag, size = 0x4, scoped, tag = 'scoped memory for tpu_custom_call.1']
    #allocation5 [shape = 'u8[16384]{0}', space=vmem, size = 0x4000, scoped, tag = 'input window, operand 1, single buffered']
    #allocation6 [shape = 's32[1]{0}', space=sflag, size = 0x4, scoped, tag = 'scoped memory for tpu_custom_call.1']
    #allocation7 [shape = 'u8[8192]{0}', space=vmem, size = 0x2000, scoped, tag = 'output window, operand 0, single buffered']
    %7 = vsyncpa [#allocation3], 0
    %8 = vsyncpa [#allocation6], 0
    %9 = vsyncpa [#allocation4], 0
    // Predicated region
    $region2: #{tpu_custom_call.1} parent=1 // pred_check
      _
    $region3: #{tpu_custom_call.1} parent=1 // pred_check_branch
      %11 = sbr.rel (0) target = $region5
    $region4: #{tpu_custom_call.1} parent=1 // pred_region
      %s13 = ssub.s32 32, 32
      %14 = vsyncadd [#allocation3], %s13
      %s16 = sshll.u32 [#allocation2], 4
      %s17 = int_to_ptr.vmem [resolvable:$true] %s16
      %19 = dma.hbm_to_vmem [thread:$0]  %s0, 32, %s17, [#allocation3]
    $region5: #{tpu_custom_call.1} parent=1 // pred_fallthru
      _
    // Predicated region
    $region6: #{tpu_custom_call.1} parent=1 // pred_check
      _
    $region7: #{tpu_custom_call.1} parent=1 // pred_check_branch
      %21 = sbr.rel (0) target = $region9
    $region8: #{tpu_custom_call.1} parent=1 // pred_region
      %s23 = ssub.s32 512, 512
      %24 = vsyncadd [#allocation6], %s23
      %s25 = sshll.u32 [#allocation5], 4
      %s26 = int_to_ptr.vmem [resolvable:$true] %s25
      %31 = dma.hbm_to_vmem [thread:$0]  %s1, 512, %s26, [#allocation6], 256, 256, 16
    $region9: #{tpu_custom_call.1} parent=1 // pred_fallthru
      _
    // Predicated region
    $region10: #{tpu_custom_call.1} parent=1 // pred_check
      _
    $region11: #{tpu_custom_call.1} parent=1 // pred_check_branch
      %33 = sbr.rel (0) target = $region13
    $region12: #{tpu_custom_call.1} parent=1 // pred_region
      %34 = dma.done [#allocation3], 32
    $region13: #{tpu_custom_call.1} parent=1 // pred_fallthru
      _
    // Predicated region
    $region14: #{tpu_custom_call.1} parent=1 // pred_check
      _
    $region15: #{tpu_custom_call.1} parent=1 // pred_check_branch
      %36 = sbr.rel (0) target = $region17
    $region16: #{tpu_custom_call.1} parent=1 // pred_region
      %37 = dma.done [#allocation6], 512
    $region17: #{tpu_custom_call.1} parent=1 // pred_fallthru
      _
    %s38 = smul.u32 0, 8
    %s39 = smul.u32 0, 8
    %s40 = sadd.s32 %s38, 7
    %s41 = ssub.s32 %s39, %s40
    %p42 = scmp.gt.s32.totalorder %s41, 4294967292
    %s43 = scalar_select %p42, %s41, 4294967292
    %p44 = scmp.lt.s32.totalorder %s43, 4
    %s45 = scalar_select %p44, %s43, 4
    %s46 = sadd.s32 %s45, 4
    %s47 = sadd.s32 %s39, 7
    %s48 = ssub.s32 %s47, %s38
    %p49 = scmp.gt.s32.totalorder %s48, 4294967292
    %s50 = scalar_select %p49, %s48, 4294967292
    %p51 = scmp.lt.s32.totalorder %s50, 4
    %s52 = scalar_select %p51, %s50, 4
    %s53 = sadd.s32 %s52, 4
    %s54 = sshra.s32 %s46, 3
    %s55 = sand.u32 %s46, 7
    %s56 = sshra.s32 %s46, 3
    %s57 = sand.u32 %s46, 7
    %s58 = smul.u32 %s54, 2
    %s59 = smul.u32 %s58, 8
    %s60 = sadd.s32 %s59, %s57
    %s61 = scalar_lea.vmem [#allocation5], %s60
    %v62 = vld [vmem:[%s61] ss:$8 sm:$0x3]
    %v64 = vlaneseq
    %v65 = vshrl.u32 %v64, 7
    %v66 = vsub.s32 0, %v65
    %v67 = vrot.slane %v62, %v66
    %v68 = vlaneseq
    %v69 = vshrl.u32 %v68, 7
    %v70 = vsub.s32 1, %v69
    %v71 = vrot.slane %v62, %v70
    %74 = vst [vmem:[#allocation7] sm:$0xff] %v67
    %75 = vst [vmem:[#allocation7 + $0x8] sm:$0xff] %v71
    %p76 = scmp.lt.s32.totalorder %s46, %s53
    // Predicated region
    $region18: #{tpu_custom_call.1} parent=1 // pred_check
      %p77 = pneg %p76
    $region19: #{tpu_custom_call.1} parent=1 // pred_check_branch
      %79 = sbr.rel (%p77) target = $region21
    $region20: #{tpu_custom_call.1} parent=1 // pred_region
      %v80 = vlaneseq
      %v81 = vshrl.u32 %v80, 7
      %v82 = vstv %s38
      %v83 = vadd.s32 %v82, %v81
      %v84 = vld [vmem:[#allocation2] sm:$0x3]
      %v85 = vstv %s39
      %v86 = vadd.s32 %v85, %v84
      %v87 = vlaneseq
      %v88 = vshrl.u32 %v87, 7
      %v89 = vsub.s32 0, %v88
      %v90 = vrot.slane %v86, %v89
      %v91 = vlaneseq
      %v92 = vshrl.u32 %v91, 7
      %v93 = vsub.s32 1, %v92
      %v94 = vrot.slane %v86, %v93
      %v95 = vsub.s32 %v90, %v83
      %v96 = vsub.s32 %v94, %v83
      %vm97 = vcmp.gt.s32.totalorder %v95, 4294967292
      %v98 = vsel %vm97, %v95, 4294967292
      %vm99 = vcmp.gt.s32.totalorder %v96, 4294967292
      %v100 = vsel %vm99, %v96, 4294967292
      %vm101 = vcmp.lt.s32.totalorder %v98, 4
      %v102 = vsel %vm101, %v98, 4
      %vm103 = vcmp.lt.s32.totalorder %v100, 4
      %v104 = vsel %vm103, %v100, 4
      %v105 = vadd.s32 %v102, 4
      %v106 = vadd.s32 %v104, 4
      %p107 = scmp.lt.s32.totalorder %s46, 1
      %p108 = scmp.ge.s32.totalorder %s53, 1
      %p109 = pnand %p107, %p108
      %p110 = pneg %p109
      // Predicated region
      $region22: #{tpu_custom_call.1} parent=20 // pred_check
        _
      $region23: #{tpu_custom_call.1} parent=20 // pred_check_branch
        %112 = sbr.rel (%p109) target = $region25
      $region24: #{tpu_custom_call.1} parent=20 // pred_region
        %vm113 = vcmp.eq.s32.totalorder %v105, 1
        %vm114 = vcmp.eq.s32.totalorder %v106, 1
        %s115 = scalar_lea.vmem [#allocation5], 1
        %v116 = vld [vmem:[%s115] ss:$8 sm:$0x3]
        %v117 = vld [vmem:[#allocation7] sm:$0xff]
        %v118 = vld [vmem:[#allocation7 + $0x8] sm:$0xff]
        %v120 = vlaneseq
        %v121 = vshrl.u32 %v120, 7
        %v122 = vsub.s32 0, %v121
        %v123 = vrot.slane %v116, %v122
        %v124 = vlaneseq
        %v125 = vshrl.u32 %v124, 7
        %v126 = vsub.s32 1, %v125
        %v127 = vrot.slane %v116, %v126
        %v130 = vsel %vm113, %v123, %v117
        %v131 = vsel %vm114, %v127, %v118
        %132 = vst [vmem:[#allocation7] sm:$0xff] %v130
        %133 = vst [vmem:[#allocation7 + $0x8] sm:$0xff] %v131
      $region25: #{tpu_custom_call.1} parent=20 // pred_fallthru
        _
      %p134 = scmp.lt.s32.totalorder %s46, 2
      %p135 = scmp.ge.s32.totalorder %s53, 2
      %p136 = pnand %p134, %p135
      %p137 = pneg %p136
      // Predicated region
      $region26: #{tpu_custom_call.1} parent=20 // pred_check
        _
      $region27: #{tpu_custom_call.1} parent=20 // pred_check_branch
        %139 = sbr.rel (%p136) target = $region29
      $region28: #{tpu_custom_call.1} parent=20 // pred_region
        %vm140 = vcmp.eq.s32.totalorder %v105, 2
        %vm141 = vcmp.eq.s32.totalorder %v106, 2
        %s142 = scalar_lea.vmem [#allocation5], 2
        %v143 = vld [vmem:[%s142] ss:$8 sm:$0x3]
        %v144 = vld [vmem:[#allocation7] sm:$0xff]
        %v145 = vld [vmem:[#allocation7 + $0x8] sm:$0xff]
        %v147 = vlaneseq
        %v148 = vshrl.u32 %v147, 7
        %v149 = vsub.s32 0, %v148
        %v150 = vrot.slane %v143, %v149
        %v151 = vlaneseq
        %v152 = vshrl.u32 %v151, 7
        %v153 = vsub.s32 1, %v152
        %v154 = vrot.slane %v143, %v153
        %v157 = vsel %vm140, %v150, %v144
        %v158 = vsel %vm141, %v154, %v145
        %159 = vst [vmem:[#allocation7] sm:$0xff] %v157
        %160 = vst [vmem:[#allocation7 + $0x8] sm:$0xff] %v158
      $region29: #{tpu_custom_call.1} parent=20 // pred_fallthru
        _
      %p161 = scmp.lt.s32.totalorder %s46, 3
      %p162 = scmp.ge.s32.totalorder %s53, 3
      %p163 = pnand %p161, %p162
      %p164 = pneg %p163
      // Predicated region
      $region30: #{tpu_custom_call.1} parent=20 // pred_check
        _
      $region31: #{tpu_custom_call.1} parent=20 // pred_check_branch
        %166 = sbr.rel (%p163) target = $region33
      $region32: #{tpu_custom_call.1} parent=20 // pred_region
        %vm167 = vcmp.eq.s32.totalorder %v105, 3
        %vm168 = vcmp.eq.s32.totalorder %v106, 3
        %s169 = scalar_lea.vmem [#allocation5], 3
        %v170 = vld [vmem:[%s169] ss:$8 sm:$0x3]
        %v171 = vld [vmem:[#allocation7] sm:$0xff]
        %v172 = vld [vmem:[#allocation7 + $0x8] sm:$0xff]
        %v174 = vlaneseq
        %v175 = vshrl.u32 %v174, 7
        %v176 = vsub.s32 0, %v175
        %v177 = vrot.slane %v170, %v176
        %v178 = vlaneseq
        %v179 = vshrl.u32 %v178, 7
        %v180 = vsub.s32 1, %v179
        %v181 = vrot.slane %v170, %v180
        %v184 = vsel %vm167, %v177, %v171
        %v185 = vsel %vm168, %v181, %v172
        %186 = vst [vmem:[#allocation7] sm:$0xff] %v184
        %187 = vst [vmem:[#allocation7 + $0x8] sm:$0xff] %v185
      $region33: #{tpu_custom_call.1} parent=20 // pred_fallthru
        _
      %p188 = scmp.lt.s32.totalorder %s46, 4
      %p189 = scmp.ge.s32.totalorder %s53, 4
      %p190 = pnand %p188, %p189
      %p191 = pneg %p190
      // Predicated region
      $region34: #{tpu_custom_call.1} parent=20 // pred_check
        _
      $region35: #{tpu_custom_call.1} parent=20 // pred_check_branch
        %193 = sbr.rel (%p190) target = $region37
      $region36: #{tpu_custom_call.1} parent=20 // pred_region
        %vm194 = vcmp.eq.s32.totalorder %v105, 4
        %vm195 = vcmp.eq.s32.totalorder %v106, 4
        %s196 = scalar_lea.vmem [#allocation5], 4
        %v197 = vld [vmem:[%s196] ss:$8 sm:$0x3]
        %v198 = vld [vmem:[#allocation7] sm:$0xff]
        %v199 = vld [vmem:[#allocation7 + $0x8] sm:$0xff]
        %v201 = vlaneseq
        %v202 = vshrl.u32 %v201, 7
        %v203 = vsub.s32 0, %v202
        %v204 = vrot.slane %v197, %v203
        %v205 = vlaneseq
        %v206 = vshrl.u32 %v205, 7
        %v207 = vsub.s32 1, %v206
        %v208 = vrot.slane %v197, %v207
        %v211 = vsel %vm194, %v204, %v198
        %v212 = vsel %vm195, %v208, %v199
        %213 = vst [vmem:[#allocation7] sm:$0xff] %v211
        %214 = vst [vmem:[#allocation7 + $0x8] sm:$0xff] %v212
      $region37: #{tpu_custom_call.1} parent=20 // pred_fallthru
        _
      %p215 = scmp.lt.s32.totalorder %s46, 5
      %p216 = scmp.ge.s32.totalorder %s53, 5
      %p217 = pnand %p215, %p216
      %p218 = pneg %p217
      // Predicated region
      $region38: #{tpu_custom_call.1} parent=20 // pred_check
        _
      $region39: #{tpu_custom_call.1} parent=20 // pred_check_branch
        %220 = sbr.rel (%p217) target = $region41
      $region40: #{tpu_custom_call.1} parent=20 // pred_region
        %vm221 = vcmp.eq.s32.totalorder %v105, 5
        %vm222 = vcmp.eq.s32.totalorder %v106, 5
        %s223 = scalar_lea.vmem [#allocation5], 5
        %v224 = vld [vmem:[%s223] ss:$8 sm:$0x3]
        %v225 = vld [vmem:[#allocation7] sm:$0xff]
        %v226 = vld [vmem:[#allocation7 + $0x8] sm:$0xff]
        %v228 = vlaneseq
        %v229 = vshrl.u32 %v228, 7
        %v230 = vsub.s32 0, %v229
        %v231 = vrot.slane %v224, %v230
        %v232 = vlaneseq
        %v233 = vshrl.u32 %v232, 7
        %v234 = vsub.s32 1, %v233
        %v235 = vrot.slane %v224, %v234
        %v238 = vsel %vm221, %v231, %v225
        %v239 = vsel %vm222, %v235, %v226
        %240 = vst [vmem:[#allocation7] sm:$0xff] %v238
        %241 = vst [vmem:[#allocation7 + $0x8] sm:$0xff] %v239
      $region41: #{tpu_custom_call.1} parent=20 // pred_fallthru
        _
      %p242 = scmp.lt.s32.totalorder %s46, 6
      %p243 = scmp.ge.s32.totalorder %s53, 6
      %p244 = pnand %p242, %p243
      %p245 = pneg %p244
      // Predicated region
      $region42: #{tpu_custom_call.1} parent=20 // pred_check
        _
      $region43: #{tpu_custom_call.1} parent=20 // pred_check_branch
        %247 = sbr.rel (%p244) target = $region45
      $region44: #{tpu_custom_call.1} parent=20 // pred_region
        %vm248 = vcmp.eq.s32.totalorder %v105, 6
        %vm249 = vcmp.eq.s32.totalorder %v106, 6
        %s250 = scalar_lea.vmem [#allocation5], 6
        %v251 = vld [vmem:[%s250] ss:$8 sm:$0x3]
        %v252 = vld [vmem:[#allocation7] sm:$0xff]
        %v253 = vld [vmem:[#allocation7 + $0x8] sm:$0xff]
        %v255 = vlaneseq
        %v256 = vshrl.u32 %v255, 7
        %v257 = vsub.s32 0, %v256
        %v258 = vrot.slane %v251, %v257
        %v259 = vlaneseq
        %v260 = vshrl.u32 %v259, 7
        %v261 = vsub.s32 1, %v260
        %v262 = vrot.slane %v251, %v261
        %v265 = vsel %vm248, %v258, %v252
        %v266 = vsel %vm249, %v262, %v253
        %267 = vst [vmem:[#allocation7] sm:$0xff] %v265
        %268 = vst [vmem:[#allocation7 + $0x8] sm:$0xff] %v266
      $region45: #{tpu_custom_call.1} parent=20 // pred_fallthru
        _
      %p269 = scmp.lt.s32.totalorder %s46, 7
      %p270 = scmp.ge.s32.totalorder %s53, 7
      %p271 = pnand %p269, %p270
      %p272 = pneg %p271
      // Predicated region
      $region46: #{tpu_custom_call.1} parent=20 // pred_check
        _
      $region47: #{tpu_custom_call.1} parent=20 // pred_check_branch
        %274 = sbr.rel (%p271) target = $region49
      $region48: #{tpu_custom_call.1} parent=20 // pred_region
        %vm275 = vcmp.eq.s32.totalorder %v105, 7
        %vm276 = vcmp.eq.s32.totalorder %v106, 7
        %s277 = scalar_lea.vmem [#allocation5], 7
        %v278 = vld [vmem:[%s277] ss:$8 sm:$0x3]
        %v279 = vld [vmem:[#allocation7] sm:$0xff]
        %v280 = vld [vmem:[#allocation7 + $0x8] sm:$0xff]
        %v282 = vlaneseq
        %v283 = vshrl.u32 %v282, 7
        %v284 = vsub.s32 0, %v283
        %v285 = vrot.slane %v278, %v284
        %v286 = vlaneseq
        %v287 = vshrl.u32 %v286, 7
        %v288 = vsub.s32 1, %v287
        %v289 = vrot.slane %v278, %v288
        %v292 = vsel %vm275, %v285, %v279
        %v293 = vsel %vm276, %v289, %v280
        %294 = vst [vmem:[#allocation7] sm:$0xff] %v292
        %295 = vst [vmem:[#allocation7 + $0x8] sm:$0xff] %v293
      $region49: #{tpu_custom_call.1} parent=20 // pred_fallthru
        _
      %p296 = scmp.lt.s32.totalorder %s46, 8
      %p297 = scmp.ge.s32.totalorder %s53, 8
      %p298 = pnand %p296, %p297
      %p299 = pneg %p298
      // Predicated region
      $region50: #{tpu_custom_call.1} parent=20 // pred_check
        _
      $region51: #{tpu_custom_call.1} parent=20 // pred_check_branch
        %301 = sbr.rel (%p298) target = $region53
      $region52: #{tpu_custom_call.1} parent=20 // pred_region
        %vm302 = vcmp.eq.s32.totalorder %v105, 8
        %vm303 = vcmp.eq.s32.totalorder %v106, 8
        %s304 = scalar_lea.vmem [#allocation5], 16
        %v305 = vld [vmem:[%s304] ss:$8 sm:$0x3]
        %v306 = vld [vmem:[#allocation7] sm:$0xff]
        %v307 = vld [vmem:[#allocation7 + $0x8] sm:$0xff]
        %v309 = vlaneseq
        %v310 = vshrl.u32 %v309, 7
        %v311 = vsub.s32 0, %v310
        %v312 = vrot.slane %v305, %v311
        %v313 = vlaneseq
        %v314 = vshrl.u32 %v313, 7
        %v315 = vsub.s32 1, %v314
        %v316 = vrot.slane %v305, %v315
        %v319 = vsel %vm302, %v312, %v306
        %v320 = vsel %vm303, %v316, %v307
        %321 = vst [vmem:[#allocation7] sm:$0xff] %v319
        %322 = vst [vmem:[#allocation7 + $0x8] sm:$0xff] %v320
      $region53: #{tpu_custom_call.1} parent=20 // pred_fallthru
        _
    $region21: #{tpu_custom_call.1} parent=1 // pred_fallthru
      _
    // Predicated region
    $region54: #{tpu_custom_call.1} parent=1 // pred_check
      _
    $region55: #{tpu_custom_call.1} parent=1 // pred_check_branch
      %324 = sbr.rel (0) target = $region57
    $region56: #{tpu_custom_call.1} parent=1 // pred_region
      %s326 = ssub.s32 256, 256
      %327 = vsyncadd [#allocation4], %s326
      %s329 = sshll.u32 [#allocation7], 4
      %s330 = int_to_ptr.vmem [resolvable:$true] %s329
      %332 = dma.vmem_to_hbm [thread:$0]  %s330, 256, %s2, [#allocation4]
    $region57: #{tpu_custom_call.1} parent=1 // pred_fallthru
      _
    // Predicated region
    $region58: #{tpu_custom_call.1} parent=1 // pred_check
      _
    $region59: #{tpu_custom_call.1} parent=1 // pred_check_branch
      %334 = sbr.rel (0) target = $region61
    $region60: #{tpu_custom_call.1} parent=1 // pred_region
      %335 = dma.done [#allocation4], 256
    $region61: #{tpu_custom_call.1} parent=1 // pred_fallthru
      _
    %336 = vsyncpa [#allocation3], 1
    %337 = vsyncpa [#allocation6], 1
    %338 = vsyncpa [#allocation4], 1

</llo_original>
